<compile_context>
chip_gen: v6e
topology: v6e:2x2x1
jax: 0.10.0
libtpu: 0.0.40
codegen_flags: <defaults>
</compile_context>

<pallas_src>
import functools

import jax
import jax.numpy as jnp
from jax.experimental import pallas as pl
from jax.experimental.pallas import tpu as pltpu


def conv1x1_tanh_kernel(w_ref, x_ref, o_ref, *, c_in, c_out):
    # w_ref: (c_out * c_in,) f32 in SMEM (flattened conv weight, row-major).
    # x_ref: (TN, c_in, T_HW)  lane-dense input tile in VMEM.
    # o_ref: (TN, c_out, T_HW) lane-dense output tile in VMEM.
    #
    # Per output lane the work is only c_in muls + (c_in-1) adds + one tanh, so
    # the 4-wide VPU plus the EUP absorb it while the kernel stays HBM-bound;
    # the MXU and its result-FIFO path are left completely idle.
    xs = [x_ref[:, c, :].astype(jnp.float32) for c in range(c_in)]
    for o in range(c_out):
        acc = xs[0] * w_ref[o * c_in + 0]
        for c in range(1, c_in):
            acc = acc + xs[c] * w_ref[o * c_in + c]
        o_ref[:, o, :] = jnp.tanh(acc).astype(o_ref.dtype)


def _cdiv(a, b):
    return -(-a // b)


def _round_up(x, m):
    return ((x + m - 1) // m) * m


def _pick_tiles(n, hw, budget_lanes):
    """Pick (TN, T_HW) block sizes for the (batch, spatial) grid axes."""
    budget = max(128, (int(budget_lanes) // 128) * 128)  # keep 128-aligned
    min_split = 2048  # do not create extra steps smaller than this many lanes

    if hw <= budget:
        # Small/medium spatial extent: take the full spatial extent per step and
        # fold batch elements together to amortize the per-step overhead.
        t_hw = hw
        tn = min(n, max(1, budget // hw))
        if _cdiv(n, tn) == 1:
            # Grid would be (1, 1): expose >=2 parallel steps for v7x's two
            # TensorCores if each step stays reasonably sized (harmless on
            # single-TC v5e/v6e).
            if n >= 2 and (n // 2) * hw >= min_split:
                tn = _cdiv(n, 2)
            elif n == 1 and hw >= 2 * min_split:
                t_hw = _round_up(_cdiv(hw, 2), 128)
        return tn, t_hw

    # Large spatial extent: one batch element per step, big lane-dense tiles.
    n_tiles = _cdiv(hw, budget)
    t_hw = _round_up(_cdiv(hw, n_tiles), 128)  # balanced, possibly ragged tail
    if hw % 128 == 0:
        # Prefer a tile that divides HW exactly -> no ragged (masked) last block.
        units = hw // 128
        for k in range(n_tiles, min(units, n_tiles + 64) + 1):
            if units % k == 0:
                t_hw = (units // k) * 128
                break
    return 1, t_hw


@functools.partial(jax.jit, static_argnames=("max_tile_hw",))
def final_output_no_skip(x_nchw, weight, *, max_tile_hw=262144):
    """x_nchw: (N, C_in, H, W) float32.
       weight: (C_out, C_in, 1, 1) float32 (PyTorch Conv2d weight, bias=False).
       Returns tanh(conv1x1(x)) of shape (N, C_out, H, W)."""
    N, C_in, H, W = x_nchw.shape
    C_out = weight.shape[0]
    HW = H * W

    # Free reshapes only -- NCHW memory order is preserved end to end.
    x_flat = x_nchw.reshape(N, C_in, HW)                    # (N, C_in, HW)
    w_flat = weight.reshape(C_out * C_in).astype(jnp.float32)

    tn, t_hw = _pick_tiles(N, HW, max_tile_hw)
    grid = (_cdiv(N, tn), _cdiv(HW, t_hw))

    # VMEM budget: double-buffered x/out blocks plus in-kernel f32 temporaries
    # (channel planes + accumulator + tanh result), with headroom.
    lanes = tn * t_hw
    io_bytes = 2 * lanes * (C_in + C_out) * 4
    tmp_bytes = lanes * (C_in + 2) * 4
    vmem_limit = int(1.25 * (io_bytes + tmp_bytes)) + (2 << 20)
    vmem_limit = max(16 << 20, min(vmem_limit, 96 << 20))

    cost = pl.CostEstimate(
        flops=2 * N * HW * C_in * C_out,
        transcendentals=N * HW * C_out,
        bytes_accessed=4 * (N * (C_in + C_out) * HW + C_out * C_in),
    )

    kernel = functools.partial(conv1x1_tanh_kernel, c_in=C_in, c_out=C_out)

    out_flat = pl.pallas_call(
        kernel,
        out_shape=jax.ShapeDtypeStruct((N, C_out, HW), x_nchw.dtype),
        grid_spec=pltpu.PrefetchScalarGridSpec(
            num_scalar_prefetch=0,
            grid=grid,
            in_specs=[
                # Tiny (C_out*C_in,) weight vector lives in SMEM for the whole
                # call; read as scalars inside the kernel.
                pl.BlockSpec(memory_space=pltpu.MemorySpace.SMEM),
                # x: TN batch elements, full channel dim, T_HW lane-dense pixels.
                pl.BlockSpec((tn, C_in, t_hw), lambda nb, tb: (nb, 0, tb)),
            ],
            out_specs=pl.BlockSpec((tn, C_out, t_hw), lambda nb, tb: (nb, 0, tb)),
        ),
        compiler_params=pltpu.CompilerParams(
            # Both grid axes are independent -> shard across v7x's 2 TensorCores.
            dimension_semantics=("parallel", "parallel"),
            vmem_limit_bytes=vmem_limit,
        ),
        cost_estimate=cost,
    )(w_flat, x_flat)

    return out_flat.reshape(N, C_out, H, W)


def _reference(x, weight):
    return jnp.tanh(jnp.einsum("nchw,oc->nohw", x, weight[:, :, 0, 0]))


if __name__ == "__main__":
    key = jax.random.PRNGKey(0)

    # Primary small shape consistent with the module's forward.
    cases = [
        ((2, 4, 16, 16), 3),   # shipped test shape: single (TN=2) block
        ((1, 4, 64, 64), 3),   # N==1: spatial split into two parallel tiles
        ((3, 4, 20, 20), 3),   # non-128-multiple HW, batch folded into one block
    ]

    ok = True
    for (n, c_in, h, w), c_out in cases:
        key, kx, kw = jax.random.split(key, 3)
        x = jax.random.normal(kx, (n, c_in, h, w), dtype=jnp.float32)
        weight = jax.random.normal(kw, (c_out, c_in, 1, 1), dtype=jnp.float32) * 0.1

        out = final_output_no_skip(x, weight)
        out = jax.block_until_ready(out)

        ref = _reference(x, weight)
        ok = ok and (out.shape == (n, c_out, h, w))
        ok = ok and bool(jnp.allclose(out, ref, atol=1e-5, rtol=1e-5))

    assert ok
    print("KERNEL_OK")
</pallas_src>

<mosaic_0001>
module attributes {stable_mosaic.version = 11 : i64} {
  func.func @conv1x1_tanh_kernel(%arg0: i32, %arg1: i32, %arg2: memref<12xf32, #tpu.memory_space<smem>>, %arg3: memref<2x4x256xf32, #tpu.memory_space<vmem>>, %arg4: memref<2x3x256xf32, #tpu.memory_space<vmem>>) attributes {dimension_semantics = [#tpu.dimension_semantics<parallel>, #tpu.dimension_semantics<parallel>], iteration_bounds = array<i64: 1, 1>, scalar_prefetch = 0 : i64, scratch_operands = 0 : i64, tpu.core_type = #tpu.core_type<tc>, window_params = [{transform_indices = @transform_0, window_bounds = array<i64: 12>}, {transform_indices = @transform_1, window_bounds = array<i64: 2, 4, 256>}, {transform_indices = @transform_2, window_bounds = array<i64: 2, 3, 256>}]} {
    %c0 = arith.constant 0 : index
    %c0_0 = arith.constant 0 : index
    %c0_1 = arith.constant 0 : index
    %0 = vector.load %arg3[%c0, %c0_0, %c0_1] : memref<2x4x256xf32, #tpu.memory_space<vmem>>, vector<2x1x256xf32>
    %1 = vector.shape_cast %0 : vector<2x1x256xf32> to vector<2x256xf32>
    %c0_2 = arith.constant 0 : index
    %c1 = arith.constant 1 : index
    %c0_3 = arith.constant 0 : index
    %2 = vector.load %arg3[%c0_2, %c1, %c0_3] : memref<2x4x256xf32, #tpu.memory_space<vmem>>, vector<2x1x256xf32>
    %3 = vector.shape_cast %2 : vector<2x1x256xf32> to vector<2x256xf32>
    %c0_4 = arith.constant 0 : index
    %c2 = arith.constant 2 : index
    %c0_5 = arith.constant 0 : index
    %4 = vector.load %arg3[%c0_4, %c2, %c0_5] : memref<2x4x256xf32, #tpu.memory_space<vmem>>, vector<2x1x256xf32>
    %5 = vector.shape_cast %4 : vector<2x1x256xf32> to vector<2x256xf32>
    %c0_6 = arith.constant 0 : index
    %c3 = arith.constant 3 : index
    %c0_7 = arith.constant 0 : index
    %6 = vector.load %arg3[%c0_6, %c3, %c0_7] : memref<2x4x256xf32, #tpu.memory_space<vmem>>, vector<2x1x256xf32>
    %7 = vector.shape_cast %6 : vector<2x1x256xf32> to vector<2x256xf32>
    %c0_8 = arith.constant 0 : index
    %8 = memref.load %arg2[%c0_8] : memref<12xf32, #tpu.memory_space<smem>>
    %9 = vector.broadcast %8 : f32 to vector<2x256xf32>
    %10 = arith.mulf %1, %9 : vector<2x256xf32>
    %c1_9 = arith.constant 1 : index
    %11 = memref.load %arg2[%c1_9] : memref<12xf32, #tpu.memory_space<smem>>
    %12 = vector.broadcast %11 : f32 to vector<2x256xf32>
    %13 = arith.mulf %3, %12 : vector<2x256xf32>
    %14 = arith.addf %10, %13 : vector<2x256xf32>
    %c2_10 = arith.constant 2 : index
    %15 = memref.load %arg2[%c2_10] : memref<12xf32, #tpu.memory_space<smem>>
    %16 = vector.broadcast %15 : f32 to vector<2x256xf32>
    %17 = arith.mulf %5, %16 : vector<2x256xf32>
    %18 = arith.addf %14, %17 : vector<2x256xf32>
    %c3_11 = arith.constant 3 : index
    %19 = memref.load %arg2[%c3_11] : memref<12xf32, #tpu.memory_space<smem>>
    %20 = vector.broadcast %19 : f32 to vector<2x256xf32>
    %21 = arith.mulf %7, %20 : vector<2x256xf32>
    %22 = arith.addf %18, %21 : vector<2x256xf32>
    %23 = math.tanh %22 : vector<2x256xf32>
    %c0_12 = arith.constant 0 : index
    %c0_13 = arith.constant 0 : index
    %c0_14 = arith.constant 0 : index
    %24 = vector.load %arg4[%c0_12, %c0_13, %c0_14] : memref<2x3x256xf32, #tpu.memory_space<vmem>>, vector<2x1x256xf32>
    %25 = vector.shape_cast %24 : vector<2x1x256xf32> to vector<2x256xf32>
    %26 = vector.shape_cast %23 : vector<2x256xf32> to vector<2x1x256xf32>
    tpu.vector_store %arg4[%c0_12, %c0_13, %c0_14], %26 {strides = array<i32>} : memref<2x3x256xf32, #tpu.memory_space<vmem>>, vector<2x1x256xf32>,
    %c4 = arith.constant 4 : index
    %27 = memref.load %arg2[%c4] : memref<12xf32, #tpu.memory_space<smem>>
    %28 = vector.broadcast %27 : f32 to vector<2x256xf32>
    %29 = arith.mulf %1, %28 : vector<2x256xf32>
    %c5 = arith.constant 5 : index
    %30 = memref.load %arg2[%c5] : memref<12xf32, #tpu.memory_space<smem>>
    %31 = vector.broadcast %30 : f32 to vector<2x256xf32>
    %32 = arith.mulf %3, %31 : vector<2x256xf32>
    %33 = arith.addf %29, %32 : vector<2x256xf32>
    %c6 = arith.constant 6 : index
    %34 = memref.load %arg2[%c6] : memref<12xf32, #tpu.memory_space<smem>>
    %35 = vector.broadcast %34 : f32 to vector<2x256xf32>
    %36 = arith.mulf %5, %35 : vector<2x256xf32>
    %37 = arith.addf %33, %36 : vector<2x256xf32>
    %c7 = arith.constant 7 : index
    %38 = memref.load %arg2[%c7] : memref<12xf32, #tpu.memory_space<smem>>
    %39 = vector.broadcast %38 : f32 to vector<2x256xf32>
    %40 = arith.mulf %7, %39 : vector<2x256xf32>
    %41 = arith.addf %37, %40 : vector<2x256xf32>
    %42 = math.tanh %41 : vector<2x256xf32>
    %c0_15 = arith.constant 0 : index
    %c1_16 = arith.constant 1 : index
    %c0_17 = arith.constant 0 : index
    %43 = vector.load %arg4[%c0_15, %c1_16, %c0_17] : memref<2x3x256xf32, #tpu.memory_space<vmem>>, vector<2x1x256xf32>
    %44 = vector.shape_cast %43 : vector<2x1x256xf32> to vector<2x256xf32>
    %45 = vector.shape_cast %42 : vector<2x256xf32> to vector<2x1x256xf32>
    tpu.vector_store %arg4[%c0_15, %c1_16, %c0_17], %45 {strides = array<i32>} : memref<2x3x256xf32, #tpu.memory_space<vmem>>, vector<2x1x256xf32>,
    %c8 = arith.constant 8 : index
    %46 = memref.load %arg2[%c8] : memref<12xf32, #tpu.memory_space<smem>>
    %47 = vector.broadcast %46 : f32 to vector<2x256xf32>
    %48 = arith.mulf %1, %47 : vector<2x256xf32>
    %c9 = arith.constant 9 : index
    %49 = memref.load %arg2[%c9] : memref<12xf32, #tpu.memory_space<smem>>
    %50 = vector.broadcast %49 : f32 to vector<2x256xf32>
    %51 = arith.mulf %3, %50 : vector<2x256xf32>
    %52 = arith.addf %48, %51 : vector<2x256xf32>
    %c10 = arith.constant 10 : index
    %53 = memref.load %arg2[%c10] : memref<12xf32, #tpu.memory_space<smem>>
    %54 = vector.broadcast %53 : f32 to vector<2x256xf32>
    %55 = arith.mulf %5, %54 : vector<2x256xf32>
    %56 = arith.addf %52, %55 : vector<2x256xf32>
    %c11 = arith.constant 11 : index
    %57 = memref.load %arg2[%c11] : memref<12xf32, #tpu.memory_space<smem>>
    %58 = vector.broadcast %57 : f32 to vector<2x256xf32>
    %59 = arith.mulf %7, %58 : vector<2x256xf32>
    %60 = arith.addf %56, %59 : vector<2x256xf32>
    %61 = math.tanh %60 : vector<2x256xf32>
    %c0_18 = arith.constant 0 : index
    %c2_19 = arith.constant 2 : index
    %c0_20 = arith.constant 0 : index
    %62 = vector.load %arg4[%c0_18, %c2_19, %c0_20] : memref<2x3x256xf32, #tpu.memory_space<vmem>>, vector<2x1x256xf32>
    %63 = vector.shape_cast %62 : vector<2x1x256xf32> to vector<2x256xf32>
    %64 = vector.shape_cast %61 : vector<2x256xf32> to vector<2x1x256xf32>
    tpu.vector_store %arg4[%c0_18, %c2_19, %c0_20], %64 {strides = array<i32>} : memref<2x3x256xf32, #tpu.memory_space<vmem>>, vector<2x1x256xf32>,
    return
  }
  func.func @transform_0(%arg0: i32, %arg1: i32) -> i32 {
    %c0_i32 = arith.constant 0 : i32
    %c0_i32_0 = arith.constant 0 : i32
    return %c0_i32 : i32
  }
  func.func @transform_1(%arg0: i32, %arg1: i32) -> (i32, i32, i32) {
    %c0_i32 = arith.constant 0 : i32
    %c0_i32_0 = arith.constant 0 : i32
    return %arg0, %c0_i32, %arg1 : i32, i32, i32
  }
  func.func @transform_2(%arg0: i32, %arg1: i32) -> (i32, i32, i32) {
    %c0_i32 = arith.constant 0 : i32
    %c0_i32_0 = arith.constant 0 : i32
    return %arg0, %c0_i32, %arg1 : i32, i32, i32
  }
}

</mosaic_0001>

<llo_original>
// kernel: final_output_no_skip.1
$region0: #{final_output_no_skip.1}
  #allocation0 [shape = 'u32[]', space=smem, size = 0x4, offset = 0x4, fixed_abs, tag = 'smem constant byte address 0x4 - core index']
  #allocation1 [shape = 'u32[144,128]{1,0:T(1,128)}', space=vmem, size = 0x12000, scoped, tag = 'internal scratch']
  %s0 = inlined_call_operand.vmem [shape: f32[12], index: 0, kind: input, shape index: {}]
  %s1 = inlined_call_operand.vmem [shape: f32[2,4,256], index: 1, kind: input, shape index: {}]
  %s2 = inlined_call_operand.vmem [shape: f32[2,3,256], index: 2, kind: output, shape index: {}]
  %s3 = sld [smem:[#allocation0]]
  $region22: #{final_output_no_skip.1} parent=0
    _
  %s5 = ssub.s32 1, %s3
  %s6 = scalar_select 0, %s5, %s3
  $region1: #{final_output_no_skip.1} parent=0
    #allocation2 [shape = 'u8[512]{0}', space=smem, size = 0x200, scoped, tag = 'input window, operand 0, single buffered']
    #allocation3 [shape = 's32[1]{0}', space=sflag, size = 0x4, scoped, tag = 'scoped memory for final_output_no_skip.1']
    %7 = vsyncpa [#allocation3], 0
    // Predicated region
    $region2: #{final_output_no_skip.1} parent=1 // pred_check
      _
    $region3: #{final_output_no_skip.1} parent=1 // pred_check_branch
      %9 = sbr.rel (0) target = $region5
    $region4: #{final_output_no_skip.1} parent=1 // pred_region
      %s11 = ssub.s32 16, 16
      %12 = vsyncadd [#allocation3], %s11
      %s14 = sshll.u32 %s0, 4
      %s15 = int_to_ptr.vmem [resolvable:$true] %s14
      %17 = dma.vmem_to_smem %s15, 16, [#allocation2], [#allocation3]
    $region5: #{final_output_no_skip.1} parent=1 // pred_fallthru
      _
    // Predicated region
    $region6: #{final_output_no_skip.1} parent=1 // pred_check
      _
    $region7: #{final_output_no_skip.1} parent=1 // pred_check_branch
      %19 = sbr.rel (0) target = $region9
    $region8: #{final_output_no_skip.1} parent=1 // pred_region
      _
    $region9: #{final_output_no_skip.1} parent=1 // pred_fallthru
      _
    // Predicated region
    $region10: #{final_output_no_skip.1} parent=1 // pred_check
      _
    $region11: #{final_output_no_skip.1} parent=1 // pred_check_branch
      %21 = sbr.rel (0) target = $region13
    $region12: #{final_output_no_skip.1} parent=1 // pred_region
      %22 = dma.done [#allocation3], 16
    $region13: #{final_output_no_skip.1} parent=1 // pred_fallthru
      _
    %23 = sfence
    %v24 = vld [vmem:[%s1] ss:$4 sm:$0x3]
    %s25 = scalar_lea.vmem %s1, 8
    %v26 = vld [vmem:[%s25] ss:$4 sm:$0x3]
    %s27 = scalar_lea.vmem %s1, 1
    %v28 = vld [vmem:[%s27] ss:$4 sm:$0x3]
    %s29 = scalar_lea.vmem %s1, 9
    %v30 = vld [vmem:[%s29] ss:$4 sm:$0x3]
    %s31 = scalar_lea.vmem %s1, 2
    %v32 = vld [vmem:[%s31] ss:$4 sm:$0x3]
    %s33 = scalar_lea.vmem %s1, 10
    %v34 = vld [vmem:[%s33] ss:$4 sm:$0x3]
    %s35 = scalar_lea.vmem %s1, 3
    %v36 = vld [vmem:[%s35] ss:$4 sm:$0x3]
    %s37 = scalar_lea.vmem %s1, 11
    %v38 = vld [vmem:[%s37] ss:$4 sm:$0x3]
    %s39 = sld [smem:[#allocation2]]
    %v40 = vstv %s39
    %v41 = vmul.f32 %v24, %v40
    %v42 = vmul.f32 %v26, %v40
    %s43 = sld [smem:[#allocation2 + $0x1]]
    %v44 = vstv %s43
    %v45 = vmul.f32 %v28, %v44
    %v46 = vmul.f32 %v30, %v44
    %v47 = vadd.f32 %v41, %v45
    %v48 = vadd.f32 %v42, %v46
    %s49 = sld [smem:[#allocation2 + $0x2]]
    %v50 = vstv %s49
    %v51 = vmul.f32 %v32, %v50
    %v52 = vmul.f32 %v34, %v50
    %v53 = vadd.f32 %v47, %v51
    %v54 = vadd.f32 %v48, %v52
    %s55 = sld [smem:[#allocation2 + $0x3]]
    %v56 = vstv %s55
    %v57 = vmul.f32 %v36, %v56
    %v58 = vmul.f32 %v38, %v56
    %v59 = vadd.f32 %v53, %v57
    %v60 = vadd.f32 %v54, %v58
    %v61 = vtanh.pop %v59
    %v62 = vtanh.pop %v60
    %v63 = vlaneseq
    %vm64 = vcmp.ge.s32.totalorder %v63, 0
    %vm65 = vcmp.lt.s32.totalorder %v63, 256
    %vm66 = vmand %vm64, %vm65
    %67 = vst.msk [vmem:[%s2] ss:$4 sm:$0x3] %vm66, %v61
    %s68 = scalar_lea.vmem %s2, 8
    %69 = vst.msk [vmem:[%s68] ss:$4 sm:$0x3] %vm66, %v62
    %s70 = sld [smem:[#allocation2 + $0x4]]
    %v71 = vstv %s70
    %v72 = vmul.f32 %v24, %v71
    %v73 = vmul.f32 %v26, %v71
    %s74 = sld [smem:[#allocation2 + $0x5]]
    %v75 = vstv %s74
    %v76 = vmul.f32 %v28, %v75
    %v77 = vmul.f32 %v30, %v75
    %v78 = vadd.f32 %v72, %v76
    %v79 = vadd.f32 %v73, %v77
    %s80 = sld [smem:[#allocation2 + $0x6]]
    %v81 = vstv %s80
    %v82 = vmul.f32 %v32, %v81
    %v83 = vmul.f32 %v34, %v81
    %v84 = vadd.f32 %v78, %v82
    %v85 = vadd.f32 %v79, %v83
    %s86 = sld [smem:[#allocation2 + $0x7]]
    %v87 = vstv %s86
    %v88 = vmul.f32 %v36, %v87
    %v89 = vmul.f32 %v38, %v87
    %v90 = vadd.f32 %v84, %v88
    %v91 = vadd.f32 %v85, %v89
    %v92 = vtanh.pop %v90
    %v93 = vtanh.pop %v91
    %s94 = scalar_lea.vmem %s2, 1
    %95 = vst.msk [vmem:[%s94] ss:$4 sm:$0x3] %vm66, %v92
    %s96 = scalar_lea.vmem %s2, 9
    %97 = vst.msk [vmem:[%s96] ss:$4 sm:$0x3] %vm66, %v93
    %s98 = sld [smem:[#allocation2 + $0x8]]
    %v99 = vstv %s98
    %v100 = vmul.f32 %v24, %v99
    %v101 = vmul.f32 %v26, %v99
    %s102 = sld [smem:[#allocation2 + $0x9]]
    %v103 = vstv %s102
    %v104 = vmul.f32 %v28, %v103
    %v105 = vmul.f32 %v30, %v103
    %v106 = vadd.f32 %v100, %v104
    %v107 = vadd.f32 %v101, %v105
    %s108 = sld [smem:[#allocation2 + $0xa]]
    %v109 = vstv %s108
    %v110 = vmul.f32 %v32, %v109
    %v111 = vmul.f32 %v34, %v109
    %v112 = vadd.f32 %v106, %v110
    %v113 = vadd.f32 %v107, %v111
    %s114 = sld [smem:[#allocation2 + $0xb]]
    %v115 = vstv %s114
    %v116 = vmul.f32 %v36, %v115
    %v117 = vmul.f32 %v38, %v115
    %v118 = vadd.f32 %v112, %v116
    %v119 = vadd.f32 %v113, %v117
    %v120 = vtanh.pop %v118
    %v121 = vtanh.pop %v119
    %s122 = scalar_lea.vmem %s2, 2
    %123 = vst.msk [vmem:[%s122] ss:$4 sm:$0x3] %vm66, %v120
    %s124 = scalar_lea.vmem %s2, 10
    %125 = vst.msk [vmem:[%s124] ss:$4 sm:$0x3] %vm66, %v121
    // Predicated region
    $region14: #{final_output_no_skip.1} parent=1 // pred_check
      _
    $region15: #{final_output_no_skip.1} parent=1 // pred_check_branch
      %127 = sbr.rel (0) target = $region17
    $region16: #{final_output_no_skip.1} parent=1 // pred_region
      _
    $region17: #{final_output_no_skip.1} parent=1 // pred_fallthru
      _
    // Predicated region
    $region18: #{final_output_no_skip.1} parent=1 // pred_check
      _
    $region19: #{final_output_no_skip.1} parent=1 // pred_check_branch
      %129 = sbr.rel (0) target = $region21
    $region20: #{final_output_no_skip.1} parent=1 // pred_region
      _
    $region21: #{final_output_no_skip.1} parent=1 // pred_fallthru
      _
    %130 = vsyncpa [#allocation3], 1

</llo_original>
